<compile_context>
chip_gen: v7x
topology: tpu7x:2x2x1
jax: 0.10.0
libtpu: 0.0.40
codegen_flags: <defaults>
</compile_context>

<pallas_src>
import functools
import math

import jax
import jax.numpy as jnp
from jax import lax
from jax.experimental import pallas as pl
from jax.experimental.pallas import tpu as pltpu


def _round_up(x, m):
    return ((x + m - 1) // m) * m


_SQUEEZED = pl.Squeezed() if hasattr(pl, "Squeezed") else None

_STRIP_Q = 32  # row-strip quantum; bounds elementwise intermediates in VMEM


def _chip_config():
    """Returns (per-input block byte budget, vmem_limit_bytes, default #partitions)."""
    kind = ""
    vmem_cap = None
    try:
        kind = jax.devices()[0].device_kind.lower()
    except Exception:
        pass
    try:
        vmem_cap = int(getattr(pltpu.get_tpu_info(), "vmem_capacity_bytes", 0)) or None
    except Exception:
        pass
    is_v7 = "v7" in kind
    block_bytes = (8 << 20) if is_v7 else (4 << 20)   # per input, per block
    vmem_limit = (48 << 20) if is_v7 else (64 << 20)  # scoped-VMEM request
    if vmem_cap:
        vmem_limit = max(32 << 20, min(vmem_limit, vmem_cap - (8 << 20)))
    num_parts = 2 if is_v7 else 1                     # TensorCores per chip
    return block_bytes, vmem_limit, num_parts


def _scaled_iou_bce_kernel(logits_ref, iou_ref, out_ref, *,
                           min_iou, max_iou, s_total, s_tile, strip):
    """Accumulates an (8, N*N) lane-dense partial sum of per-element BCE terms.

    The proposal mask is NOT applied here (it is constant over S, so it can be
    applied once to the column sums in the wrapper).  Rows at/after S — block
    overhang or fully out-of-range (clamped) blocks — are selected out so they
    contribute exactly zero even if their VMEM contents are garbage.
    """
    # Zero this partition's VMEM-resident accumulator on its first step.
    @pl.when(pl.program_id(1) == 0)
    def _():
        out_ref[...] = jnp.zeros_like(out_ref)

    nn = out_ref.shape[-1]
    n_strips = s_tile // strip
    inv_range = 1.0 / (max_iou - min_iou)

    # Global row of the first row of this *unclamped* block: fully OOB blocks
    # (whose DMA index got clamped) therefore have every row masked.
    base = (pl.program_id(0) * pl.num_programs(1) + pl.program_id(1)) * s_tile
    row_ids = lax.broadcasted_iota(jnp.int32, (strip, nn), 0)  # hoisted

    def body(i, acc):
        r0 = pl.multiple_of(i * strip, strip)
        x = logits_ref[pl.ds(r0, strip), :].astype(jnp.float32)
        u = iou_ref[pl.ds(r0, strip), :].astype(jnp.float32)
        # linear_scale: clamp((iou - min_iou) / (max_iou - min_iou), 0, 1)
        y = jnp.clip((u - min_iou) * inv_range, 0.0, 1.0)
        # Stable BCE-with-logits (matches F.binary_cross_entropy_with_logits):
        #   max(x, 0) - x*y + log1p(exp(-|x|))
        bce = jnp.maximum(x, 0.0) - x * y + jnp.log1p(jnp.exp(-jnp.abs(x)))
        # Select (not multiply) out rows past S — immune to garbage NaN/Inf.
        valid = (base + r0 + row_ids) < s_total
        v = jnp.where(valid, bce, 0.0)
        # Fold the strip 8 rows at a time: pure vreg adds, no cross-lane reduce.
        return acc + jnp.sum(v.reshape(strip // 8, 8, nn), axis=0)

    acc = lax.fori_loop(0, n_strips, body,
                        jnp.zeros((8, nn), jnp.float32),
                        unroll=n_strips <= 8)
    out_ref[...] += acc


def scaled_iou_loss(logits2d, iou2d, mask2d, *,
                    min_iou=0.5, max_iou=1.0, weight=1.0,
                    s_tile=None, num_parts=None):
    """JAX/Pallas equivalent of ScaledIoULoss.forward.

    logits2d, iou2d: (S, N, N) float (f32 or bf16 — streamed as-is)
    mask2d:          (N, N)    bool / {0,1}
    Returns (loss * weight, {'loss/iou': loss}).
    """
    if weight == 0:
        # Matches the PyTorch module's early return (both outputs are zero).
        zero = jnp.float32(0.0)
        return zero, {"loss/iou": zero}

    assert logits2d.shape == iou2d.shape, f"{logits2d.shape} != {iou2d.shape}"
    S, N, N2 = logits2d.shape
    assert N == N2 and mask2d.shape == (N, N)
    NN = N * N

    block_bytes, vmem_limit, default_parts = _chip_config()

    # Lane-dense layout; reshape is metadata-only (no extra HBM pass), and there
    # is deliberately no astype here — the kernel upcasts per strip.
    logits = logits2d.reshape(S, NN)
    iou = iou2d.reshape(S, NN)
    it_l = jnp.dtype(logits.dtype).itemsize
    it_u = jnp.dtype(iou.dtype).itemsize
    row_align = max(8, 32 // min(it_l, it_u))   # 8 (f32), 16 (bf16), 32 (8-bit)
    bytes_per_row = NN * max(it_l, it_u)

    # ---- partitioning across TensorCores (v7x: 2; v5e/v6e: 1) ---------------
    if num_parts is None:
        num_parts = default_parts

    # ---- tile size -----------------------------------------------------------
    if s_tile is None:
        cap_rows = max(row_align,
                       (block_bytes // max(bytes_per_row, 1)) // row_align * row_align)
        share = _round_up(-(-S // num_parts), row_align)   # rows per partition
        n_blk = -(-share // cap_rows)                      # blocks per partition
        s_tile = _round_up(-(-share // n_blk), row_align)  # balanced vs S
        if s_tile > _STRIP_Q:
            s_tile = _round_up(s_tile, _STRIP_Q)
    assert s_tile % 8 == 0, "s_tile must be a multiple of 8 (sublane count)"
    strip = s_tile if s_tile <= _STRIP_Q else math.gcd(s_tile, _STRIP_Q)

    n_tiles = pl.cdiv(S, s_tile)
    num_parts = max(1, min(num_parts, n_tiles))
    steps = pl.cdiv(n_tiles, num_parts)

    def in_map(p, s):
        # Clamp the DMA to the last real block; the kernel's row mask uses the
        # *unclamped* index, so duplicated / overhang rows contribute zero.
        return (jnp.minimum(p * steps + s, n_tiles - 1), 0)

    kernel = functools.partial(
        _scaled_iou_bce_kernel,
        min_iou=float(min_iou), max_iou=float(max_iou),
        s_total=S, s_tile=s_tile, strip=strip)

    cost = pl.CostEstimate(
        flops=10 * S * NN,
        transcendentals=2 * S * NN,
        bytes_accessed=S * NN * (it_l + it_u) + num_parts * 8 * NN * 4)

    partials = pl.pallas_call(
        kernel,
        out_shape=jax.ShapeDtypeStruct((num_parts, 8, NN), jnp.float32),
        grid_spec=pltpu.PrefetchScalarGridSpec(
            num_scalar_prefetch=0,
            grid=(num_parts, steps),           # (TC partitions, S-reduction)
            in_specs=[pl.BlockSpec((s_tile, NN), in_map),
                      pl.BlockSpec((s_tile, NN), in_map)],
            out_specs=pl.BlockSpec((_SQUEEZED, 8, NN), lambda p, s: (p, 0, 0)),
        ),
        compiler_params=pltpu.CompilerParams(
            dimension_semantics=("parallel", "arbitrary"),
            vmem_limit_bytes=int(vmem_limit)),
        cost_estimate=cost,
    )(logits, iou)

    # Tiny final reduction: deferred proposal mask + mean (wrapper glue).
    mask_f = mask2d.reshape(-1).astype(jnp.float32)       # (NN,)
    col_sums = jnp.sum(partials, axis=(0, 1))             # (NN,)
    masked_sum = jnp.sum(col_sums * mask_f)
    p_cnt = jnp.sum(mask_f)                               # P = #True in mask2d
    denom = jnp.maximum(jnp.float32(S) * p_cnt, 1.0)
    loss = jnp.where(p_cnt > 0, masked_sum / denom, jnp.float32(0.0))
    return loss * jnp.float32(weight), {"loss/iou": loss}


def _reference(logits2d, iou2d, mask2d, *, min_iou, max_iou, weight):
    """Pure-JAX reference mirroring the PyTorch code (masked_select + mean)."""
    S = logits2d.shape[0]
    mask = jnp.asarray(mask2d, dtype=bool)
    x = logits2d.astype(jnp.float32)[:, mask].reshape(S, -1)
    u = iou2d.astype(jnp.float32)[:, mask].reshape(S, -1)
    y = jnp.clip((u - min_iou) / (max_iou - min_iou), 0.0, 1.0)
    bce = jnp.maximum(x, 0.0) - x * y + jnp.log1p(jnp.exp(-jnp.abs(x)))
    loss = jnp.mean(bce)
    return loss * weight, {"loss/iou": loss}


if __name__ == "__main__":
    # Deterministic "parameters" of the module (its __init__ args).
    MIN_IOU, MAX_IOU, WEIGHT = 0.5, 1.0, 1.0

    key = jax.random.PRNGKey(0)
    k1, k2, k3, k4, k5, k6 = jax.random.split(key, 6)

    N = 16
    ii = jnp.arange(N)[:, None]
    jj = jnp.arange(N)[None, :]
    mask2d = ii <= jj                        # upper-triangular proposal mask

    # Case 1: small canonical shapes (S sentences, N clips), single block.
    S = 8
    logits2d = jax.random.normal(k1, (S, N, N), dtype=jnp.float32)
    iou2d = jax.random.uniform(k2, (S, N, N), dtype=jnp.float32)
    out_w, aux = scaled_iou_loss(logits2d, iou2d, mask2d,
                                 min_iou=MIN_IOU, max_iou=MAX_IOU, weight=WEIGHT)
    out_w = jax.block_until_ready(out_w)
    ref_w, ref_aux = _reference(logits2d, iou2d, mask2d,
                                min_iou=MIN_IOU, max_iou=MAX_IOU, weight=WEIGHT)
    assert jnp.allclose(out_w, ref_w, atol=1e-5, rtol=1e-5), (out_w, ref_w)
    assert jnp.allclose(aux["loss/iou"], ref_aux["loss/iou"], atol=1e-5, rtol=1e-5)

    # Case 2: multi-block path with 2 partitions, an overhanging last block and
    # a clamped fully-out-of-range block (S=20, s_tile=8 -> 3 real blocks).
    S2 = 20
    logits2d_b = jax.random.normal(k3, (S2, N, N), dtype=jnp.float32)
    iou2d_b = jax.random.uniform(k4, (S2, N, N), dtype=jnp.float32)
    out_w2, aux2 = scaled_iou_loss(logits2d_b, iou2d_b, mask2d,
                                   min_iou=MIN_IOU, max_iou=MAX_IOU,
                                   weight=WEIGHT, s_tile=8, num_parts=2)
    out_w2 = jax.block_until_ready(out_w2)
    ref_w2, ref_aux2 = _reference(logits2d_b, iou2d_b, mask2d,
                                  min_iou=MIN_IOU, max_iou=MAX_IOU, weight=WEIGHT)
    assert jnp.allclose(out_w2, ref_w2, atol=1e-5, rtol=1e-5), (out_w2, ref_w2)
    assert jnp.allclose(aux2["loss/iou"], ref_aux2["loss/iou"],
                        atol=1e-5, rtol=1e-5)

    # Case 3: bf16 inputs streamed narrow and upcast in-kernel; odd S exercises
    # the in-kernel row mask (no wrapper-side padding anywhere).
    S3 = 13
    logits2d_c = jax.random.normal(k5, (S3, N, N),
                                   dtype=jnp.float32).astype(jnp.bfloat16)
    iou2d_c = jax.random.uniform(k6, (S3, N, N),
                                 dtype=jnp.float32).astype(jnp.bfloat16)
    out_w3, aux3 = scaled_iou_loss(logits2d_c, iou2d_c, mask2d,
                                   min_iou=MIN_IOU, max_iou=MAX_IOU, weight=WEIGHT)
    out_w3 = jax.block_until_ready(out_w3)
    ref_w3, _ = _reference(logits2d_c, iou2d_c, mask2d,
                           min_iou=MIN_IOU, max_iou=MAX_IOU, weight=WEIGHT)
    assert jnp.allclose(out_w3, ref_w3, atol=1e-4, rtol=1e-4), (out_w3, ref_w3)

    print("KERNEL_OK")
</pallas_src>

<mosaic_0001>
module attributes {stable_mosaic.version = 11 : i64} {
  func.func @_scaled_iou_bce_kernel(%arg0: i32, %arg1: i32, %arg2: memref<8x256xf32, #tpu.memory_space<vmem>>, %arg3: memref<8x256xf32, #tpu.memory_space<vmem>>, %arg4: memref<1x8x256xf32, #tpu.memory_space<vmem>>) attributes {dimension_semantics = [#tpu.dimension_semantics<parallel>, #tpu.dimension_semantics<arbitrary>], iteration_bounds = array<i64: 1, 1>, scalar_prefetch = 0 : i64, scratch_operands = 0 : i64, tpu.core_type = #tpu.core_type<tc>, window_params = [{transform_indices = @transform_0, window_bounds = array<i64: 8, 256>}, {transform_indices = @transform_1, window_bounds = array<i64: 8, 256>}, {transform_indices = @transform_2, window_bounds = array<i64: 1, 8, 256>}]} {
    %c0_i32 = arith.constant 0 : i32
    %0 = arith.cmpi eq, %arg1, %c0_i32 : i32
    %1 = arith.extui %0 : i1 to i32
    %c0_i32_0 = arith.constant 0 : i32
    %2 = arith.cmpi ne, %1, %c0_i32_0 : i32
    scf.if %2 {
      %cst_20 = arith.constant 0.000000e+00 : f32
      %48 = vector.broadcast %cst_20 : f32 to vector<8x256xf32>
      %c0_21 = arith.constant 0 : index
      %c0_22 = arith.constant 0 : index
      %c0_23 = arith.constant 0 : index
      %49 = vector.load %arg4[%c0_21, %c0_22, %c0_23] : memref<1x8x256xf32, #tpu.memory_space<vmem>>, vector<1x8x256xf32>
      %50 = vector.shape_cast %49 : vector<1x8x256xf32> to vector<8x256xf32>
      %51 = vector.shape_cast %48 : vector<8x256xf32> to vector<1x8x256xf32>
      tpu.vector_store %arg4[%c0_21, %c0_22, %c0_23], %51 {strides = array<i32>} : memref<1x8x256xf32, #tpu.memory_space<vmem>>, vector<1x8x256xf32>,
    } else {
    }
    %c1_i32 = arith.constant 1 : i32
    %3 = arith.muli %arg0, %c1_i32 : i32
    %4 = arith.addi %3, %arg1 : i32
    %c8_i32 = arith.constant 8 : i32
    %5 = arith.muli %4, %c8_i32 : i32
    %6 = tpu.iota {dimensions = array<i32: 0>} : vector<8x256xi32>
    %cst = arith.constant 0.000000e+00 : f32
    %7 = vector.broadcast %cst : f32 to vector<8x256xf32>
    %c0_i32_1 = arith.constant 0 : i32
    %c8_i32_2 = arith.constant 8 : i32
    %8 = arith.muli %c0_i32_1, %c8_i32_2 : i32
    %9 = tpu.assume_multiple %8, 8 : i32
    %10 = arith.index_cast %9 : i32 to index
    %c0 = arith.constant 0 : index
    %11 = vector.load %arg2[%10, %c0] : memref<8x256xf32, #tpu.memory_space<vmem>>, vector<8x256xf32>
    %12 = arith.index_cast %9 : i32 to index
    %c0_3 = arith.constant 0 : index
    %13 = vector.load %arg3[%12, %c0_3] : memref<8x256xf32, #tpu.memory_space<vmem>>, vector<8x256xf32>
    %cst_4 = arith.constant 5.000000e-01 : f32
    %14 = vector.broadcast %cst_4 : f32 to vector<8x256xf32>
    %15 = arith.subf %13, %14 : vector<8x256xf32>
    %cst_5 = arith.constant 2.000000e+00 : f32
    %16 = vector.broadcast %cst_5 : f32 to vector<8x256xf32>
    %17 = arith.mulf %15, %16 : vector<8x256xf32>
    %cst_6 = arith.constant 0.000000e+00 : f32
    %cst_7 = arith.constant 1.000000e+00 : f32
    %18 = vector.broadcast %cst_6 : f32 to vector<8x256xf32>
    %19 = arith.maximumf %18, %17 : vector<8x256xf32>
    %20 = vector.broadcast %cst_7 : f32 to vector<8x256xf32>
    %21 = arith.minimumf %20, %19 : vector<8x256xf32>
    %cst_8 = arith.constant 0.000000e+00 : f32
    %22 = vector.broadcast %cst_8 : f32 to vector<8x256xf32>
    %23 = arith.maximumf %11, %22 : vector<8x256xf32>
    %24 = arith.mulf %11, %21 : vector<8x256xf32>
    %25 = arith.subf %23, %24 : vector<8x256xf32>
    %26 = math.absf %11 : vector<8x256xf32>
    %cst_9 = arith.constant 0.000000e+00 : f32
    %27 = vector.broadcast %cst_9 : f32 to vector<8x256xf32>
    %28 = arith.subf %27, %26 : vector<8x256xf32>
    %29 = math.exp %28 : vector<8x256xf32>
    %30 = math.log1p %29 : vector<8x256xf32>
    %31 = arith.addf %25, %30 : vector<8x256xf32>
    %32 = arith.addi %5, %9 : i32
    %33 = vector.broadcast %32 : i32 to vector<8x256xi32>
    %34 = arith.addi %33, %6 : vector<8x256xi32>
    %c8_i32_10 = arith.constant 8 : i32
    %35 = vector.broadcast %c8_i32_10 : i32 to vector<8x256xi32>
    %36 = arith.cmpi slt, %34, %35 : vector<8x256xi32>
    %cst_11 = arith.constant 0.000000e+00 : f32
    %37 = vector.broadcast %cst_11 : f32 to vector<8x256xf32>
    %38 = arith.select %36, %31, %37 : vector<8x256xi1>, vector<8x256xf32>
    %39 = vector.shape_cast %38 : vector<8x256xf32> to vector<1x8x256xf32>
    %cst_12 = arith.constant dense<0.000000e+00> : vector<8x256xf32>
    %40 = vector.multi_reduction <add>, %39, %cst_12 [0] : vector<1x8x256xf32> to vector<8x256xf32>
    %41 = arith.addf %7, %40 : vector<8x256xf32>
    %c1_i32_13 = arith.constant 1 : i32
    %c0_14 = arith.constant 0 : index
    %c0_15 = arith.constant 0 : index
    %c0_16 = arith.constant 0 : index
    %42 = vector.load %arg4[%c0_14, %c0_15, %c0_16] : memref<1x8x256xf32, #tpu.memory_space<vmem>>, vector<1x8x256xf32>
    %43 = vector.shape_cast %42 : vector<1x8x256xf32> to vector<8x256xf32>
    %44 = arith.addf %43, %41 : vector<8x256xf32>
    %c0_17 = arith.constant 0 : index
    %c0_18 = arith.constant 0 : index
    %c0_19 = arith.constant 0 : index
    %45 = vector.load %arg4[%c0_17, %c0_18, %c0_19] : memref<1x8x256xf32, #tpu.memory_space<vmem>>, vector<1x8x256xf32>
    %46 = vector.shape_cast %45 : vector<1x8x256xf32> to vector<8x256xf32>
    %47 = vector.shape_cast %44 : vector<8x256xf32> to vector<1x8x256xf32>
    tpu.vector_store %arg4[%c0_17, %c0_18, %c0_19], %47 {strides = array<i32>} : memref<1x8x256xf32, #tpu.memory_space<vmem>>, vector<1x8x256xf32>,
    return
  }
  func.func @transform_0(%arg0: i32, %arg1: i32) -> (i32, i32) {
    %c1_i32 = arith.constant 1 : i32
    %0 = arith.muli %arg0, %c1_i32 : i32
    %1 = arith.addi %0, %arg1 : i32
    %c0_i32 = arith.constant 0 : i32
    %2 = arith.minsi %1, %c0_i32 : i32
    %c0_i32_0 = arith.constant 0 : i32
    %c0_i32_1 = arith.constant 0 : i32
    return %2, %c0_i32_0 : i32, i32
  }
  func.func @transform_1(%arg0: i32, %arg1: i32) -> (i32, i32) {
    %c1_i32 = arith.constant 1 : i32
    %0 = arith.muli %arg0, %c1_i32 : i32
    %1 = arith.addi %0, %arg1 : i32
    %c0_i32 = arith.constant 0 : i32
    %2 = arith.minsi %1, %c0_i32 : i32
    %c0_i32_0 = arith.constant 0 : i32
    %c0_i32_1 = arith.constant 0 : i32
    return %2, %c0_i32_0 : i32, i32
  }
  func.func @transform_2(%arg0: i32, %arg1: i32) -> (i32, i32, i32) {
    %c0_i32 = arith.constant 0 : i32
    %c0_i32_0 = arith.constant 0 : i32
    %c0_i32_1 = arith.constant 0 : i32
    return %arg0, %c0_i32, %c0_i32_0 : i32, i32, i32
  }
}

</mosaic_0001>

<llo_original>
// kernel: tpu_custom_call.1
$region0: #{tpu_custom_call.1}
  #allocation0 [shape = 'u32[]', space=smem, size = 0x4, offset = 0x4, fixed_abs, tag = 'smem constant byte address 0x4 - core index']
  #allocation1 [shape = 'u32[144,128]{1,0:T(1,128)}', space=vmem, size = 0x12000, scoped, tag = 'internal scratch']
  %s0 = inlined_call_operand.hbm [shape: f32[8,256], index: 0, kind: input, shape index: {}]
  %s1 = inlined_call_operand.hbm [shape: f32[8,256], index: 1, kind: input, shape index: {}]
  %s2 = inlined_call_operand.hbm [shape: f32[1,8,256], index: 2, kind: output, shape index: {}]
  %s3 = sld [smem:[#allocation0]]
  $region30: #{tpu_custom_call.1} parent=0
    _
  %s5 = ssub.s32 1, %s3
  %s6 = scalar_select 0, %s5, %s3
  $region1: #{tpu_custom_call.1} parent=0
    #allocation2 [shape = 'u8[8192]{0}', space=vmem, size = 0x2000, scoped, tag = 'input window, operand 0, single buffered']
    #allocation3 [shape = 's32[1]{0}', space=sflag, size = 0x4, scoped, tag = 'scoped memory for tpu_custom_call.1']
    #allocation4 [shape = 's32[1]{0}', space=sflag, size = 0x4, scoped, tag = 'scoped memory for tpu_custom_call.1']
    #allocation5 [shape = 'u8[8192]{0}', space=vmem, size = 0x2000, scoped, tag = 'input window, operand 1, single buffered']
    #allocation6 [shape = 's32[1]{0}', space=sflag, size = 0x4, scoped, tag = 'scoped memory for tpu_custom_call.1']
    #allocation7 [shape = 'u8[8192]{0}', space=vmem, size = 0x2000, scoped, tag = 'output window, operand 0, single buffered']
    %7 = vsyncpa [#allocation3], 0
    %8 = vsyncpa [#allocation6], 0
    %9 = vsyncpa [#allocation4], 0
    // Predicated region
    $region2: #{tpu_custom_call.1} parent=1 // pred_check
      _
    $region3: #{tpu_custom_call.1} parent=1 // pred_check_branch
      %11 = sbr.rel (0) target = $region5
    $region4: #{tpu_custom_call.1} parent=1 // pred_region
      %s12 = sadd.s32 0, 0
      %p13 = scmp.lt.s32.totalorder %s12, 0
      %s14 = scalar_select %p13, %s12, 0
      %s16 = ssub.s32 256, 256
      %17 = vsyncadd [#allocation3], %s16
      %s18 = smul.addr %s14, 2
      %s19 = smul.addr %s18, 128
      %s20 = scalar_lea.hbm %s0, %s19
      %s22 = sshll.u32 [#allocation2], 4
      %s23 = int_to_ptr.vmem [resolvable:$true] %s22
      %25 = dma.hbm_to_vmem [thread:$0]  %s20, 256, %s23, [#allocation3]
    $region5: #{tpu_custom_call.1} parent=1 // pred_fallthru
      _
    // Predicated region
    $region6: #{tpu_custom_call.1} parent=1 // pred_check
      _
    $region7: #{tpu_custom_call.1} parent=1 // pred_check_branch
      %27 = sbr.rel (0) target = $region9
    $region8: #{tpu_custom_call.1} parent=1 // pred_region
      %s28 = sadd.s32 0, 0
      %p29 = scmp.lt.s32.totalorder %s28, 0
      %s30 = scalar_select %p29, %s28, 0
      %s32 = ssub.s32 256, 256
      %33 = vsyncadd [#allocation6], %s32
      %s34 = smul.addr %s30, 2
      %s35 = smul.addr %s34, 128
      %s36 = scalar_lea.hbm %s1, %s35
      %s38 = sshll.u32 [#allocation5], 4
      %s39 = int_to_ptr.vmem [resolvable:$true] %s38
      %41 = dma.hbm_to_vmem [thread:$0]  %s36, 256, %s39, [#allocation6]
    $region9: #{tpu_custom_call.1} parent=1 // pred_fallthru
      _
    // Predicated region
    $region10: #{tpu_custom_call.1} parent=1 // pred_check
      _
    $region11: #{tpu_custom_call.1} parent=1 // pred_check_branch
      %43 = sbr.rel (0) target = $region13
    $region12: #{tpu_custom_call.1} parent=1 // pred_region
      %44 = dma.done [#allocation3], 256
    $region13: #{tpu_custom_call.1} parent=1 // pred_fallthru
      _
    // Predicated region
    $region14: #{tpu_custom_call.1} parent=1 // pred_check
      _
    $region15: #{tpu_custom_call.1} parent=1 // pred_check_branch
      %46 = sbr.rel (0) target = $region17
    $region16: #{tpu_custom_call.1} parent=1 // pred_region
      %47 = dma.done [#allocation6], 256
    $region17: #{tpu_custom_call.1} parent=1 // pred_fallthru
      _
    %s48 = sadd.s32 0, 0
    %p49 = scmp.lt.s32.totalorder %s48, 0
    %s50 = scalar_select %p49, %s48, 0
    %s51 = sadd.s32 0, 0
    %p52 = scmp.lt.s32.totalorder %s51, 0
    %s53 = scalar_select %p52, %s51, 0
    %p54 = scmp.eq.s32.totalorder 0, 0
    // Predicated region
    $region18: #{tpu_custom_call.1} parent=1 // pred_check
      %p55 = pneg %p54
    $region19: #{tpu_custom_call.1} parent=1 // pred_check_branch
      %57 = sbr.rel (%p55) target = $region21
    $region20: #{tpu_custom_call.1} parent=1 // pred_region
      %58 = vst [vmem:[#allocation7] sm:$0xff] 0.0
      %59 = vst [vmem:[#allocation7 + $0x8] sm:$0xff] 0.0
    $region21: #{tpu_custom_call.1} parent=1 // pred_fallthru
      _
    %s60 = sadd.s32 0, 0
    %s61 = smul.u32 %s60, 8
    %v62 = vlaneseq
    %v63 = vshrl.u32 %v62, 7
    %s64 = smul.u32 0, 2
    %s65 = smul.addr %s64, 8
    %s66 = scalar_lea.vmem [#allocation2], %s65
    %v67 = vld [vmem:[%s66] sm:$0xff]
    %v68 = vld [vmem:[%s66 + $0x8] sm:$0xff]
    %s69 = smul.addr %s64, 8
    %s70 = scalar_lea.vmem [#allocation5], %s69
    %v71 = vld [vmem:[%s70] sm:$0xff]
    %v72 = vld [vmem:[%s70 + $0x8] sm:$0xff]
    %v73 = vsub.f32 %v71, 0.5
    %v74 = vsub.f32 %v72, 0.5
    %v75 = vmul.f32 %v73, 2.0
    %v76 = vmul.f32 %v74, 2.0
    %v77 = vmax.f32 %v75, 0.0
    %v78 = vmax.f32 %v76, 0.0
    %v79 = vmin.f32 %v77, 1.0
    %v80 = vmin.f32 %v78, 1.0
    %v81 = vmax.f32 %v67, 0.0
    %v82 = vmax.f32 %v68, 0.0
    %v83 = vmul.f32 %v67, %v79
    %v84 = vmul.f32 %v68, %v80
    %v85 = vsub.f32 %v81, %v83
    %v86 = vsub.f32 %v82, %v84
    %v87 = vand.u32 2147483647, %v67
    %v88 = vand.u32 2147483647, %v68
    %v89 = vsub.f32 0.0, %v87
    %v90 = vsub.f32 0.0, %v88
    %v91 = vmul.f32 %v89, 1.442695
    %v92 = vpow.pop %v91
    %v93 = vmul.f32 %v90, 1.442695
    %v94 = vpow.pop %v93
    %v95 = vadd.f32 %v92, 1.0
    %v96 = vlog2.pop %v95
    %v97 = vmul.f32 %v96, 0.6931472
    %v98 = vmul.f32 -0.5, %v92
    %v99 = vadd.f32 %v98, 1.0
    %v100 = vmul.f32 %v99, %v92
    %v101 = vand.u32 2147483647, %v92
    %vm102 = vcmp.lt.f32.partialorder %v101, 0.0004427343
    %v103 = vsel %vm102, %v100, %v97
    %v104 = vadd.f32 %v94, 1.0
    %v105 = vlog2.pop %v104
    %v106 = vmul.f32 %v105, 0.6931472
    %v107 = vmul.f32 -0.5, %v94
    %v108 = vadd.f32 %v107, 1.0
    %v109 = vmul.f32 %v108, %v94
    %v110 = vand.u32 2147483647, %v94
    %vm111 = vcmp.lt.f32.partialorder %v110, 0.0004427343
    %v112 = vsel %vm111, %v109, %v106
    %v113 = vadd.f32 %v85, %v103
    %v114 = vadd.f32 %v86, %v112
    %s115 = sadd.s32 %s61, 0
    %v116 = vstv %s115
    %v117 = vadd.s32 %v116, %v63
    %vm118 = vcmp.lt.s32.totalorder %v117, 8
    %v119 = vsel %vm118, %v113, 0.0
    %v120 = vsel %vm118, %v114, 0.0
    %v121 = vadd.f32 %v119, 0.0
    %v122 = vadd.f32 %v120, 0.0
    %v123 = vadd.f32 %v121, 0.0
    %v124 = vadd.f32 %v122, 0.0
    %v125 = vld [vmem:[#allocation7] sm:$0xff]
    %v126 = vld [vmem:[#allocation7 + $0x8] sm:$0xff]
    %v127 = vadd.f32 %v125, %v123
    %v128 = vadd.f32 %v126, %v124
    %129 = vst [vmem:[#allocation7] sm:$0xff] %v127
    %130 = vst [vmem:[#allocation7 + $0x8] sm:$0xff] %v128
    // Predicated region
    $region22: #{tpu_custom_call.1} parent=1 // pred_check
      _
    $region23: #{tpu_custom_call.1} parent=1 // pred_check_branch
      %132 = sbr.rel (0) target = $region25
    $region24: #{tpu_custom_call.1} parent=1 // pred_region
      %s134 = ssub.s32 256, 256
      %135 = vsyncadd [#allocation4], %s134
      %s137 = sshll.u32 [#allocation7], 4
      %s138 = int_to_ptr.vmem [resolvable:$true] %s137
      %140 = dma.vmem_to_hbm [thread:$0]  %s138, 256, %s2, [#allocation4]
    $region25: #{tpu_custom_call.1} parent=1 // pred_fallthru
      _
    // Predicated region
    $region26: #{tpu_custom_call.1} parent=1 // pred_check
      _
    $region27: #{tpu_custom_call.1} parent=1 // pred_check_branch
      %142 = sbr.rel (0) target = $region29
    $region28: #{tpu_custom_call.1} parent=1 // pred_region
      %143 = dma.done [#allocation4], 256
    $region29: #{tpu_custom_call.1} parent=1 // pred_fallthru
      _
    %144 = vsyncpa [#allocation3], 1
    %145 = vsyncpa [#allocation6], 1
    %146 = vsyncpa [#allocation4], 1

</llo_original>
